<compile_context>
chip_gen: v7x
topology: tpu7x:2x2x1
jax: 0.10.0
libtpu: 0.0.40
codegen_flags: <defaults>
</compile_context>

<pallas_src>
import jax
import jax.numpy as jnp
from jax.experimental import pallas as pl
from jax.experimental.pallas import tpu as pltpu

EPS = 1e-5  # nn.BatchNorm2d default eps


def _make_kernel(N, H, W, C):
    """Builds the Pallas kernel closed over the static problem shape."""
    NH, WC = N * H, W * C
    inv_m = 1.0 / float(N * H * W)

    # Lane shifts (multiples of C) for the per-channel tree reduction over the
    # W groups along the lane axis.  Requires W to be a power of two.
    group_shifts = []
    g = W // 2
    while g >= 1:
        group_shifts.append(g * C)
        g //= 2

    def kernel(x_ref, w1_ref, g1_ref, be1_ref, w2_ref, g2_ref, be2_ref,
               out_ref):
        x = x_ref[...]                                        # (NH, WC) f32

        # 0/1 bf16 boundary-mask columns from a narrow (NH, 1) iota: rows with
        # h==0 (h==H-1) must read zero padding for the kh=0 (kh=2) tap.  The
        # only rolled rows that cross an image boundary are exactly these.
        h_idx = jax.lax.broadcasted_iota(jnp.int32, (NH, 1), 0) % H
        mask_up = (h_idx != 0).astype(jnp.bfloat16)           # (NH, 1)
        mask_dn = (h_idx != (H - 1)).astype(jnp.bfloat16)     # (NH, 1)

        def conv3x3(act, w_ref):
            # Row shifts for kh = 0 / 2 (zero padding along H).  Cast to bf16
            # first, then zero the boundary rows on the 16-bit values.
            a_md = act.astype(jnp.bfloat16)                            # x[n, h]
            a_up = pltpu.roll(act, shift=1, axis=0).astype(jnp.bfloat16) \
                * mask_up                                              # x[n, h-1]
            a_dn = pltpu.roll(act, shift=NH - 1, axis=0).astype(jnp.bfloat16) \
                * mask_dn                                              # x[n, h+1]
            # Single K = 3*WC contraction (one MXU push/drain), f32 accumulate.
            lhs = jnp.concatenate([a_up, a_md, a_dn], axis=1)  # (NH, 3*WC) bf16
            return jnp.dot(lhs, w_ref[...],
                           preferred_element_type=jnp.float32)  # (NH, WC) f32

        def batchnorm(y, g_row, be_row):
            # Fused single pass: per-(w,c) sums over rows (sublane reduce),
            # then a lane-roll tree to sum the W groups per channel (result is
            # already broadcast in the (w, c) lane pattern).
            s = jnp.sum(y, axis=0, keepdims=True)             # (1, WC)
            ss = jnp.sum(y * y, axis=0, keepdims=True)        # (1, WC)
            st = jnp.concatenate([s, ss], axis=0)             # (2, WC)
            for sh in group_shifts:
                st = st + pltpu.roll(st, shift=sh, axis=1)
            mean = st[0:1] * inv_m
            var = st[1:2] * inv_m - mean * mean               # biased var
            return (y - mean) * jax.lax.rsqrt(var + EPS) * g_row + be_row

        h1 = conv3x3(x, w1_ref)
        h1 = jnp.maximum(batchnorm(h1, g1_ref[...], be1_ref[...]), 0.0)

        h2 = conv3x3(h1, w2_ref)
        h2 = batchnorm(h2, g2_ref[...], be2_ref[...])

        out_ref[...] = jnp.maximum(h2 + x, 0.0)               # residual + ReLU

    return kernel


def _fused_conv_weights(w_oihw, W):
    """(Cout,Cin,3,3) PyTorch weights -> one (3*W*C, W*C) bf16 matrix.

    For each kh, mats[kh][w_in*C + ci, w_out*C + co] = w[co, ci, kh, kw] iff
    w_in == w_out + (kw - 1); zero-padding along width falls out naturally.
    The three kh matrices are concatenated along K to match the in-kernel
    lane-concatenated LHS [a_up(kh=0), a_md(kh=1), a_dn(kh=2)].
    """
    C = w_oihw.shape[0]
    w = jnp.transpose(w_oihw, (2, 3, 1, 0)).astype(jnp.float32)  # (kh,kw,Ci,Co)
    mats = []
    for kh in range(3):
        m = jnp.zeros((W * C, W * C), jnp.float32)
        for kw in range(3):
            band = jnp.eye(W, k=1 - kw, dtype=jnp.float32)       # [w_in, w_out]
            m = m + jnp.kron(band, w[kh, kw])
        mats.append(m)
    # bf16 operands for the MXU (f32 accumulation happens in the kernel).
    return jnp.concatenate(mats, axis=0).astype(jnp.bfloat16)    # (3*WC, WC)


def residual_block(x_nchw, params):
    """Wrapper: NCHW in / NCHW out, single Pallas kernel invocation."""
    N, C, H, W = x_nchw.shape
    assert W & (W - 1) == 0, "width must be a power of two for the BN lane tree"

    # NCHW -> lane-dense (N*H, W*C) slab (W*C = 128 in the test -> full lanes).
    x2d = jnp.transpose(x_nchw, (0, 2, 3, 1)).reshape(N * H, W * C)
    x2d = x2d.astype(jnp.float32)

    def row(v):  # per-channel vector -> (1, W*C) row in the (w, c) lane layout
        return jnp.tile(v.astype(jnp.float32), W).reshape(1, W * C)

    # Conv biases b1/b2 are intentionally NOT passed: train-mode BN subtracts
    # the batch mean right after the conv, so per-channel biases cancel exactly.
    args = (
        x2d,
        _fused_conv_weights(params["w1"], W),
        row(params["g1"]), row(params["be1"]),
        _fused_conv_weights(params["w2"], W),
        row(params["g2"]), row(params["be2"]),
    )

    vmem = pl.BlockSpec(memory_space=pltpu.MemorySpace.VMEM)
    out2d = pl.pallas_call(
        _make_kernel(N, H, W, C),
        out_shape=jax.ShapeDtypeStruct((N * H, W * C), jnp.float32),
        in_specs=[vmem] * len(args),
        out_specs=vmem,
    )(*args)

    return jnp.transpose(out2d.reshape(N, H, W, C), (0, 3, 1, 2))  # back to NCHW


def residual_block_reference(x, params):
    """Pure-JAX f32 reference matching PyTorch semantics (training-mode BN).

    Note: the reference DOES apply the conv biases (as nn.Conv2d would); they
    cancel exactly through train-mode BatchNorm, so the kernel (which drops
    them) must still match.
    """
    def conv(x, w, b):
        y = jax.lax.conv_general_dilated(
            x, w, window_strides=(1, 1), padding="SAME",
            dimension_numbers=("NCHW", "OIHW", "NCHW"),
            precision=jax.lax.Precision.HIGHEST)
        return y + b[None, :, None, None]

    def bn(x, g, be):
        mean = jnp.mean(x, axis=(0, 2, 3), keepdims=True)
        var = jnp.mean((x - mean) ** 2, axis=(0, 2, 3), keepdims=True)
        return ((x - mean) * jax.lax.rsqrt(var + EPS)
                * g[None, :, None, None] + be[None, :, None, None])

    out = jax.nn.relu(bn(conv(x, params["w1"], params["b1"]),
                         params["g1"], params["be1"]))
    out = bn(conv(out, params["w2"], params["b2"]),
             params["g2"], params["be2"])
    return jax.nn.relu(out + x)


if __name__ == "__main__":
    N, C, H, W = 2, 8, 16, 16   # W*C = 128 -> full lane width

    key = jax.random.PRNGKey(0)
    kx, kw1, kb1, kw2, kb2 = jax.random.split(key, 5)

    x = jax.random.normal(kx, (N, C, H, W), dtype=jnp.float32)

    params = {
        # conv weights in PyTorch OIHW layout: (Cout, Cin, kh, kw)
        "w1": 0.1 * jax.random.normal(kw1, (C, C, 3, 3), dtype=jnp.float32),
        "b1": 0.1 * jax.random.normal(kb1, (C,), dtype=jnp.float32),
        "w2": 0.1 * jax.random.normal(kw2, (C, C, 3, 3), dtype=jnp.float32),
        "b2": 0.1 * jax.random.normal(kb2, (C,), dtype=jnp.float32),
        # BatchNorm affine params (PyTorch init: weight=1, bias=0)
        "g1": jnp.ones((C,), jnp.float32),
        "be1": jnp.zeros((C,), jnp.float32),
        "g2": jnp.ones((C,), jnp.float32),
        "be2": jnp.zeros((C,), jnp.float32),
    }

    out = jax.block_until_ready(residual_block(x, params))
    ref = jax.block_until_ready(residual_block_reference(x, params))

    assert out.shape == (N, C, H, W)
    # Tolerance reflects bf16 MXU operands (f32 accumulation) vs. an f32
    # HIGHEST-precision reference across two stacked conv+BN stages.
    assert jnp.allclose(out, ref, atol=3e-2, rtol=3e-2), (
        f"max err {jnp.max(jnp.abs(out - ref))}")

    print("KERNEL_OK")
</pallas_src>

<mosaic_0001>
module attributes {stable_mosaic.version = 11 : i64} {
  func.func @kernel(%arg0: memref<32x128xf32, #tpu.memory_space<vmem>>, %arg1: memref<384x128xbf16, #tpu.memory_space<vmem>>, %arg2: memref<1x128xf32, #tpu.memory_space<vmem>>, %arg3: memref<1x128xf32, #tpu.memory_space<vmem>>, %arg4: memref<384x128xbf16, #tpu.memory_space<vmem>>, %arg5: memref<1x128xf32, #tpu.memory_space<vmem>>, %arg6: memref<1x128xf32, #tpu.memory_space<vmem>>, %arg7: memref<32x128xf32, #tpu.memory_space<vmem>>) attributes {dimension_semantics = [], scalar_prefetch = 0 : i64, scratch_operands = 0 : i64, tpu.core_type = #tpu.core_type<tc>} {
    %c0 = arith.constant 0 : index
    %c0_0 = arith.constant 0 : index
    %0 = vector.load %arg0[%c0, %c0_0] : memref<32x128xf32, #tpu.memory_space<vmem>>, vector<32x128xf32>
    %1 = tpu.iota {dimensions = array<i32: 0>} : vector<32x1xi32>
    %c16_i32 = arith.constant 16 : i32
    %c0_i32 = arith.constant 0 : i32
    %2 = arith.cmpi eq, %c16_i32, %c0_i32 : i32
    %c1_i32 = arith.constant 1 : i32
    %3 = arith.select %2, %c1_i32, %c16_i32 : i32
    %4 = vector.broadcast %3 : i32 to vector<32x1xi32>
    %5 = arith.remsi %1, %4 : vector<32x1xi32>
    %c0_i32_1 = arith.constant 0 : i32
    %6 = vector.broadcast %c0_i32_1 : i32 to vector<32x1xi32>
    %7 = arith.cmpi ne, %5, %6 : vector<32x1xi32>
    %c0_i32_2 = arith.constant 0 : i32
    %8 = vector.broadcast %c0_i32_2 : i32 to vector<32x1xi32>
    %9 = arith.cmpi slt, %5, %8 : vector<32x1xi32>
    %c0_i32_3 = arith.constant 0 : i32
    %10 = arith.cmpi slt, %3, %c0_i32_3 : i32
    %11 = vector.broadcast %10 : i1 to vector<32x1xi1>
    %12 = vector.broadcast %11 : vector<32x1xi1> to vector<32x1xi1>
    %13 = arith.xori %9, %12 : vector<32x1xi1>
    %14 = arith.andi %13, %7 : vector<32x1xi1>
    %15 = vector.broadcast %3 : i32 to vector<32x1xi32>
    %16 = arith.addi %5, %15 : vector<32x1xi32>
    %17 = arith.select %14, %16, %5 : vector<32x1xi1>, vector<32x1xi32>
    %c0_i32_4 = arith.constant 0 : i32
    %18 = vector.broadcast %c0_i32_4 : i32 to vector<32x1xi32>
    %19 = arith.cmpi ne, %17, %18 : vector<32x1xi32>
    %20 = arith.extui %19 : vector<32x1xi1> to vector<32x1xi32>
    %21 = arith.sitofp %20 : vector<32x1xi32> to vector<32x1xf32>
    %22 = arith.truncf %21 : vector<32x1xf32> to vector<32x1xbf16>
    %c15_i32 = arith.constant 15 : i32
    %23 = vector.broadcast %c15_i32 : i32 to vector<32x1xi32>
    %24 = arith.cmpi ne, %17, %23 : vector<32x1xi32>
    %25 = arith.extui %24 : vector<32x1xi1> to vector<32x1xi32>
    %26 = arith.sitofp %25 : vector<32x1xi32> to vector<32x1xf32>
    %27 = arith.truncf %26 : vector<32x1xf32> to vector<32x1xbf16>
    %28 = arith.truncf %0 : vector<32x128xf32> to vector<32x128xbf16>
    %c1_i32_5 = arith.constant 1 : i32
    %29 = tpu.dynamic_rotate %0 by %c1_i32_5 dim 0 : vector<32x128xf32>, i32 -> vector<32x128xf32>
    %30 = arith.truncf %29 : vector<32x128xf32> to vector<32x128xbf16>
    %31 = vector.broadcast %22 : vector<32x1xbf16> to vector<32x128xbf16>
    %32 = arith.mulf %30, %31 : vector<32x128xbf16>
    %c31_i32 = arith.constant 31 : i32
    %33 = tpu.dynamic_rotate %0 by %c31_i32 dim 0 : vector<32x128xf32>, i32 -> vector<32x128xf32>
    %34 = arith.truncf %33 : vector<32x128xf32> to vector<32x128xbf16>
    %35 = vector.broadcast %27 : vector<32x1xbf16> to vector<32x128xbf16>
    %36 = arith.mulf %34, %35 : vector<32x128xbf16>
    %37 = tpu.concatenate %32, %28, %36 in 1 : vector<32x128xbf16>, vector<32x128xbf16>, vector<32x128xbf16> -> vector<32x384xbf16>
    %c0_6 = arith.constant 0 : index
    %c0_7 = arith.constant 0 : index
    %38 = vector.load %arg1[%c0_6, %c0_7] : memref<384x128xbf16, #tpu.memory_space<vmem>>, vector<384x128xbf16>
    %cst = arith.constant dense<0.000000e+00> : vector<32x128xf32>
    %39 = tpu.matmul %37, %38, %cst {dimension_numbers = #tpu.dot_dimension_numbers<[1], [0], [0], [1], [0, 0, 1, 1], [], []>} : vector<32x384xbf16>, vector<384x128xbf16>, vector<32x128xf32> -> vector<32x128xf32>
    %c0_8 = arith.constant 0 : index
    %c0_9 = arith.constant 0 : index
    %40 = vector.load %arg2[%c0_8, %c0_9] : memref<1x128xf32, #tpu.memory_space<vmem>>, vector<1x128xf32>
    %c0_10 = arith.constant 0 : index
    %c0_11 = arith.constant 0 : index
    %41 = vector.load %arg3[%c0_10, %c0_11] : memref<1x128xf32, #tpu.memory_space<vmem>>, vector<1x128xf32>
    %cst_12 = arith.constant dense<0.000000e+00> : vector<128xf32>
    %42 = vector.multi_reduction <add>, %39, %cst_12 [0] : vector<32x128xf32> to vector<128xf32>
    %43 = vector.shape_cast %42 : vector<128xf32> to vector<1x128xf32>
    %44 = arith.mulf %39, %39 : vector<32x128xf32>
    %cst_13 = arith.constant dense<0.000000e+00> : vector<128xf32>
    %45 = vector.multi_reduction <add>, %44, %cst_13 [0] : vector<32x128xf32> to vector<128xf32>
    %46 = vector.shape_cast %45 : vector<128xf32> to vector<1x128xf32>
    %47 = tpu.concatenate %43, %46 in 0 : vector<1x128xf32>, vector<1x128xf32> -> vector<2x128xf32>
    %c64_i32 = arith.constant 64 : i32
    %48 = tpu.dynamic_rotate %47 by %c64_i32 dim 1 : vector<2x128xf32>, i32 -> vector<2x128xf32>
    %49 = arith.addf %47, %48 : vector<2x128xf32>
    %c32_i32 = arith.constant 32 : i32
    %50 = tpu.dynamic_rotate %49 by %c32_i32 dim 1 : vector<2x128xf32>, i32 -> vector<2x128xf32>
    %51 = arith.addf %49, %50 : vector<2x128xf32>
    %c16_i32_14 = arith.constant 16 : i32
    %52 = tpu.dynamic_rotate %51 by %c16_i32_14 dim 1 : vector<2x128xf32>, i32 -> vector<2x128xf32>
    %53 = arith.addf %51, %52 : vector<2x128xf32>
    %c8_i32 = arith.constant 8 : i32
    %54 = tpu.dynamic_rotate %53 by %c8_i32 dim 1 : vector<2x128xf32>, i32 -> vector<2x128xf32>
    %55 = arith.addf %53, %54 : vector<2x128xf32>
    %56 = vector.extract_strided_slice %55 {offsets = [0, 0], sizes = [1, 128], strides = [1, 1]} : vector<2x128xf32> to vector<1x128xf32>
    %cst_15 = arith.constant 0.001953125 : f32
    %57 = vector.broadcast %cst_15 : f32 to vector<1x128xf32>
    %58 = arith.mulf %56, %57 : vector<1x128xf32>
    %59 = vector.extract_strided_slice %55 {offsets = [1, 0], sizes = [1, 128], strides = [1, 1]} : vector<2x128xf32> to vector<1x128xf32>
    %cst_16 = arith.constant 0.001953125 : f32
    %60 = vector.broadcast %cst_16 : f32 to vector<1x128xf32>
    %61 = arith.mulf %59, %60 : vector<1x128xf32>
    %62 = arith.mulf %58, %58 : vector<1x128xf32>
    %63 = arith.subf %61, %62 : vector<1x128xf32>
    %64 = vector.broadcast %58 : vector<1x128xf32> to vector<32x128xf32>
    %65 = arith.subf %39, %64 : vector<32x128xf32>
    %cst_17 = arith.constant 9.99999974E-6 : f32
    %66 = vector.broadcast %cst_17 : f32 to vector<1x128xf32>
    %67 = arith.addf %63, %66 : vector<1x128xf32>
    %68 = math.rsqrt %67 : vector<1x128xf32>
    %69 = vector.broadcast %68 : vector<1x128xf32> to vector<32x128xf32>
    %70 = arith.mulf %65, %69 : vector<32x128xf32>
    %71 = vector.broadcast %40 : vector<1x128xf32> to vector<32x128xf32>
    %72 = arith.mulf %70, %71 : vector<32x128xf32>
    %73 = vector.broadcast %41 : vector<1x128xf32> to vector<32x128xf32>
    %74 = arith.addf %72, %73 : vector<32x128xf32>
    %cst_18 = arith.constant 0.000000e+00 : f32
    %75 = vector.broadcast %cst_18 : f32 to vector<32x128xf32>
    %76 = arith.maximumf %74, %75 : vector<32x128xf32>
    %77 = arith.truncf %76 : vector<32x128xf32> to vector<32x128xbf16>
    %c1_i32_19 = arith.constant 1 : i32
    %78 = tpu.dynamic_rotate %76 by %c1_i32_19 dim 0 : vector<32x128xf32>, i32 -> vector<32x128xf32>
    %79 = arith.truncf %78 : vector<32x128xf32> to vector<32x128xbf16>
    %80 = vector.broadcast %22 : vector<32x1xbf16> to vector<32x128xbf16>
    %81 = arith.mulf %79, %80 : vector<32x128xbf16>
    %c31_i32_20 = arith.constant 31 : i32
    %82 = tpu.dynamic_rotate %76 by %c31_i32_20 dim 0 : vector<32x128xf32>, i32 -> vector<32x128xf32>
    %83 = arith.truncf %82 : vector<32x128xf32> to vector<32x128xbf16>
    %84 = vector.broadcast %27 : vector<32x1xbf16> to vector<32x128xbf16>
    %85 = arith.mulf %83, %84 : vector<32x128xbf16>
    %86 = tpu.concatenate %81, %77, %85 in 1 : vector<32x128xbf16>, vector<32x128xbf16>, vector<32x128xbf16> -> vector<32x384xbf16>
    %c0_21 = arith.constant 0 : index
    %c0_22 = arith.constant 0 : index
    %87 = vector.load %arg4[%c0_21, %c0_22] : memref<384x128xbf16, #tpu.memory_space<vmem>>, vector<384x128xbf16>
    %cst_23 = arith.constant dense<0.000000e+00> : vector<32x128xf32>
    %88 = tpu.matmul %86, %87, %cst_23 {dimension_numbers = #tpu.dot_dimension_numbers<[1], [0], [0], [1], [0, 0, 1, 1], [], []>} : vector<32x384xbf16>, vector<384x128xbf16>, vector<32x128xf32> -> vector<32x128xf32>
    %c0_24 = arith.constant 0 : index
    %c0_25 = arith.constant 0 : index
    %89 = vector.load %arg5[%c0_24, %c0_25] : memref<1x128xf32, #tpu.memory_space<vmem>>, vector<1x128xf32>
    %c0_26 = arith.constant 0 : index
    %c0_27 = arith.constant 0 : index
    %90 = vector.load %arg6[%c0_26, %c0_27] : memref<1x128xf32, #tpu.memory_space<vmem>>, vector<1x128xf32>
    %cst_28 = arith.constant dense<0.000000e+00> : vector<128xf32>
    %91 = vector.multi_reduction <add>, %88, %cst_28 [0] : vector<32x128xf32> to vector<128xf32>
    %92 = vector.shape_cast %91 : vector<128xf32> to vector<1x128xf32>
    %93 = arith.mulf %88, %88 : vector<32x128xf32>
    %cst_29 = arith.constant dense<0.000000e+00> : vector<128xf32>
    %94 = vector.multi_reduction <add>, %93, %cst_29 [0] : vector<32x128xf32> to vector<128xf32>
    %95 = vector.shape_cast %94 : vector<128xf32> to vector<1x128xf32>
    %96 = tpu.concatenate %92, %95 in 0 : vector<1x128xf32>, vector<1x128xf32> -> vector<2x128xf32>
    %c64_i32_30 = arith.constant 64 : i32
    %97 = tpu.dynamic_rotate %96 by %c64_i32_30 dim 1 : vector<2x128xf32>, i32 -> vector<2x128xf32>
    %98 = arith.addf %96, %97 : vector<2x128xf32>
    %c32_i32_31 = arith.constant 32 : i32
    %99 = tpu.dynamic_rotate %98 by %c32_i32_31 dim 1 : vector<2x128xf32>, i32 -> vector<2x128xf32>
    %100 = arith.addf %98, %99 : vector<2x128xf32>
    %c16_i32_32 = arith.constant 16 : i32
    %101 = tpu.dynamic_rotate %100 by %c16_i32_32 dim 1 : vector<2x128xf32>, i32 -> vector<2x128xf32>
    %102 = arith.addf %100, %101 : vector<2x128xf32>
    %c8_i32_33 = arith.constant 8 : i32
    %103 = tpu.dynamic_rotate %102 by %c8_i32_33 dim 1 : vector<2x128xf32>, i32 -> vector<2x128xf32>
    %104 = arith.addf %102, %103 : vector<2x128xf32>
    %105 = vector.extract_strided_slice %104 {offsets = [0, 0], sizes = [1, 128], strides = [1, 1]} : vector<2x128xf32> to vector<1x128xf32>
    %cst_34 = arith.constant 0.001953125 : f32
    %106 = vector.broadcast %cst_34 : f32 to vector<1x128xf32>
    %107 = arith.mulf %105, %106 : vector<1x128xf32>
    %108 = vector.extract_strided_slice %104 {offsets = [1, 0], sizes = [1, 128], strides = [1, 1]} : vector<2x128xf32> to vector<1x128xf32>
    %cst_35 = arith.constant 0.001953125 : f32
    %109 = vector.broadcast %cst_35 : f32 to vector<1x128xf32>
    %110 = arith.mulf %108, %109 : vector<1x128xf32>
    %111 = arith.mulf %107, %107 : vector<1x128xf32>
    %112 = arith.subf %110, %111 : vector<1x128xf32>
    %113 = vector.broadcast %107 : vector<1x128xf32> to vector<32x128xf32>
    %114 = arith.subf %88, %113 : vector<32x128xf32>
    %cst_36 = arith.constant 9.99999974E-6 : f32
    %115 = vector.broadcast %cst_36 : f32 to vector<1x128xf32>
    %116 = arith.addf %112, %115 : vector<1x128xf32>
    %117 = math.rsqrt %116 : vector<1x128xf32>
    %118 = vector.broadcast %117 : vector<1x128xf32> to vector<32x128xf32>
    %119 = arith.mulf %114, %118 : vector<32x128xf32>
    %120 = vector.broadcast %89 : vector<1x128xf32> to vector<32x128xf32>
    %121 = arith.mulf %119, %120 : vector<32x128xf32>
    %122 = vector.broadcast %90 : vector<1x128xf32> to vector<32x128xf32>
    %123 = arith.addf %121, %122 : vector<32x128xf32>
    %124 = arith.addf %123, %0 : vector<32x128xf32>
    %cst_37 = arith.constant 0.000000e+00 : f32
    %125 = vector.broadcast %cst_37 : f32 to vector<32x128xf32>
    %126 = arith.maximumf %124, %125 : vector<32x128xf32>
    %c0_38 = arith.constant 0 : index
    %c0_39 = arith.constant 0 : index
    %127 = vector.load %arg7[%c0_38, %c0_39] : memref<32x128xf32, #tpu.memory_space<vmem>>, vector<32x128xf32>
    tpu.vector_store %arg7[%c0_38, %c0_39], %126 {strides = array<i32>} : memref<32x128xf32, #tpu.memory_space<vmem>>, vector<32x128xf32>,
    return
  }
}

</mosaic_0001>

<llo_original>
// kernel: tpu_custom_call.1
$region0: #{tpu_custom_call.1}
  #allocation0 [shape = 'u32[]', space=smem, size = 0x4, offset = 0x4, fixed_abs, tag = 'smem constant byte address 0x4 - core index']
  #allocation1 [shape = 'u32[144,128]{1,0:T(1,128)}', space=vmem, size = 0x12000, scoped, tag = 'internal scratch']
  %s0 = inlined_call_operand.hbm [shape: f32[32,128], index: 0, kind: input, shape index: {}]
  %s1 = inlined_call_operand.hbm [shape: bf16[384,128], index: 1, kind: input, shape index: {}]
  %s2 = inlined_call_operand.vmem [shape: f32[1,128], index: 2, kind: input, shape index: {}]
  %s3 = inlined_call_operand.vmem [shape: f32[1,128], index: 3, kind: input, shape index: {}]
  %s4 = inlined_call_operand.hbm [shape: bf16[384,128], index: 4, kind: input, shape index: {}]
  %s5 = inlined_call_operand.vmem [shape: f32[1,128], index: 5, kind: input, shape index: {}]
  %s6 = inlined_call_operand.vmem [shape: f32[1,128], index: 6, kind: input, shape index: {}]
  %s7 = inlined_call_operand.hbm [shape: f32[32,128], index: 7, kind: output, shape index: {}]
  %s8 = sld [smem:[#allocation0]]
  $region50: #{tpu_custom_call.1} parent=0
    _
  %s10 = ssub.s32 1, %s8
  %s11 = scalar_select 0, %s10, %s8
  $region1: #{tpu_custom_call.1} parent=0
    #allocation2 [shape = 'u8[16384]{0}', space=vmem, size = 0x4000, scoped, tag = 'input window, operand 0, single buffered']
    #allocation3 [shape = 's32[1]{0}', space=sflag, size = 0x4, scoped, tag = 'scoped memory for tpu_custom_call.1']
    #allocation4 [shape = 's32[1]{0}', space=sflag, size = 0x4, scoped, tag = 'scoped memory for tpu_custom_call.1']
    #allocation5 [shape = 'u8[98304]{0}', space=vmem, size = 0x18000, scoped, tag = 'input window, operand 1, single buffered']
    #allocation6 [shape = 's32[1]{0}', space=sflag, size = 0x4, scoped, tag = 'scoped memory for tpu_custom_call.1']
    #allocation7 [shape = 'u8[98304]{0}', space=vmem, size = 0x18000, scoped, tag = 'input window, operand 4, single buffered']
    #allocation8 [shape = 'u8[16384]{0}', space=vmem, size = 0x4000, scoped, tag = 'output window, operand 0, single buffered']
    %12 = vsyncpa [#allocation3], 0
    %13 = vsyncpa [#allocation6], 0
    %14 = vsyncpa [#allocation4], 0
    // Predicated region
    $region2: #{tpu_custom_call.1} parent=1 // pred_check
      _
    $region3: #{tpu_custom_call.1} parent=1 // pred_check_branch
      %16 = sbr.rel (0) target = $region5
    $region4: #{tpu_custom_call.1} parent=1 // pred_region
      %s18 = ssub.s32 512, 512
      %19 = vsyncadd [#allocation3], %s18
      %s20 = sshll.u32 [#allocation2], 4
      %s21 = int_to_ptr.vmem [resolvable:$true] %s20
      %26 = dma.hbm_to_vmem [thread:$0]  %s0, 512, %s21, [#allocation3], 128, 128, 8
    $region5: #{tpu_custom_call.1} parent=1 // pred_fallthru
      _
    // Predicated region
    $region6: #{tpu_custom_call.1} parent=1 // pred_check
      _
    $region7: #{tpu_custom_call.1} parent=1 // pred_check_branch
      %28 = sbr.rel (0) target = $region9
    $region8: #{tpu_custom_call.1} parent=1 // pred_region
      %s30 = ssub.s32 3072, 3072
      %31 = vsyncadd [#allocation6], %s30
      %s32 = sshll.u32 [#allocation5], 4
      %s33 = int_to_ptr.vmem [resolvable:$true] %s32
      %38 = dma.hbm_to_vmem [thread:$0]  %s1, 3072, %s33, [#allocation6], 64, 64, 4
    $region9: #{tpu_custom_call.1} parent=1 // pred_fallthru
      _
    // Predicated region
    $region10: #{tpu_custom_call.1} parent=1 // pred_check
      _
    $region11: #{tpu_custom_call.1} parent=1 // pred_check_branch
      %40 = sbr.rel (0) target = $region13
    $region12: #{tpu_custom_call.1} parent=1 // pred_region
      _
    $region13: #{tpu_custom_call.1} parent=1 // pred_fallthru
      _
    // Predicated region
    $region14: #{tpu_custom_call.1} parent=1 // pred_check
      _
    $region15: #{tpu_custom_call.1} parent=1 // pred_check_branch
      %42 = sbr.rel (0) target = $region17
    $region16: #{tpu_custom_call.1} parent=1 // pred_region
      _
    $region17: #{tpu_custom_call.1} parent=1 // pred_fallthru
      _
    // Predicated region
    $region18: #{tpu_custom_call.1} parent=1 // pred_check
      _
    $region19: #{tpu_custom_call.1} parent=1 // pred_check_branch
      %44 = sbr.rel (0) target = $region21
    $region20: #{tpu_custom_call.1} parent=1 // pred_region
      %s46 = ssub.s32 3072, 3072
      %47 = vsyncadd [#allocation6], %s46
      %s48 = sshll.u32 [#allocation7], 4
      %s49 = int_to_ptr.vmem [resolvable:$true] %s48
      %54 = dma.hbm_to_vmem [thread:$0]  %s4, 3072, %s49, [#allocation6], 64, 64, 4
    $region21: #{tpu_custom_call.1} parent=1 // pred_fallthru
      _
    // Predicated region
    $region22: #{tpu_custom_call.1} parent=1 // pred_check
      _
    $region23: #{tpu_custom_call.1} parent=1 // pred_check_branch
      %56 = sbr.rel (0) target = $region25
    $region24: #{tpu_custom_call.1} parent=1 // pred_region
      _
    $region25: #{tpu_custom_call.1} parent=1 // pred_fallthru
      _
    // Predicated region
    $region26: #{tpu_custom_call.1} parent=1 // pred_check
      _
    $region27: #{tpu_custom_call.1} parent=1 // pred_check_branch
      %58 = sbr.rel (0) target = $region29
    $region28: #{tpu_custom_call.1} parent=1 // pred_region
      _
    $region29: #{tpu_custom_call.1} parent=1 // pred_fallthru
      _
    // Predicated region
    $region30: #{tpu_custom_call.1} parent=1 // pred_check
      _
    $region31: #{tpu_custom_call.1} parent=1 // pred_check_branch
      %60 = sbr.rel (0) target = $region33
    $region32: #{tpu_custom_call.1} parent=1 // pred_region
      %61 = dma.done [#allocation3], 512
    $region33: #{tpu_custom_call.1} parent=1 // pred_fallthru
      _
    // Predicated region
    $region34: #{tpu_custom_call.1} parent=1 // pred_check
      _
    $region35: #{tpu_custom_call.1} parent=1 // pred_check_branch
      %63 = sbr.rel (0) target = $region37
    $region36: #{tpu_custom_call.1} parent=1 // pred_region
      %64 = dma.done [#allocation6], 3072
    $region37: #{tpu_custom_call.1} parent=1 // pred_fallthru
      _
    // Predicated region
    $region38: #{tpu_custom_call.1} parent=1 // pred_check
      _
    $region39: #{tpu_custom_call.1} parent=1 // pred_check_branch
      %66 = sbr.rel (0) target = $region41
    $region40: #{tpu_custom_call.1} parent=1 // pred_region
      %67 = dma.done [#allocation6], 3072
    $region41: #{tpu_custom_call.1} parent=1 // pred_fallthru
      _
    %v69 = vld [vmem:[#allocation2] sm:$0xff]
    %v70 = vld [vmem:[#allocation2 + $0x8] sm:$0xff]
    %v71 = vld [vmem:[#allocation2 + $0x10] sm:$0xff]
    %v72 = vld [vmem:[#allocation2 + $0x18] sm:$0xff]
    %v73 = vlaneseq
    %v74 = vshrl.u32 %v73, 7
    %v75 = vadd.s32 %v74, 8
    %v76 = vadd.s32 %v74, 16
    %v77 = vadd.s32 %v74, 24
    %vm78 = vcmp.lt.s32.totalorder %v74, 0
    %v79 = vsub.s32 0, %v74
    %v80 = vsel %vm78, %v79, %v74
    %v81 = vshrl.u32 %v80, 4
    %v82 = vand.u32 %v80, 15
    %v83 = vsub.s32 0, %v82
    %v84 = vsel %vm78, %v83, %v82
    %vm85 = vcmp.lt.s32.totalorder %v75, 0
    %v86 = vsub.s32 0, %v75
    %v87 = vsel %vm85, %v86, %v75
    %v88 = vshrl.u32 %v87, 4
    %v89 = vand.u32 %v87, 15
    %v90 = vsub.s32 0, %v89
    %v91 = vsel %vm85, %v90, %v89
    %vm92 = vcmp.lt.s32.totalorder %v76, 0
    %v93 = vsub.s32 0, %v76
    %v94 = vsel %vm92, %v93, %v76
    %v95 = vshrl.u32 %v94, 4
    %v96 = vand.u32 %v94, 15
    %v97 = vsub.s32 0, %v96
    %v98 = vsel %vm92, %v97, %v96
    %vm99 = vcmp.lt.s32.totalorder %v77, 0
    %v100 = vsub.s32 0, %v77
    %v101 = vsel %vm99, %v100, %v77
    %v102 = vshrl.u32 %v101, 4
    %v103 = vand.u32 %v101, 15
    %v104 = vsub.s32 0, %v103
    %v105 = vsel %vm99, %v104, %v103
    %vm106 = vcmp.ne.s32.totalorder %v84, 0
    %vm107 = vcmp.ne.s32.totalorder %v91, 0
    %vm108 = vcmp.ne.s32.totalorder %v98, 0
    %vm109 = vcmp.ne.s32.totalorder %v105, 0
    %vm110 = vcmp.lt.s32.totalorder %v84, 0
    %vm111 = vcmp.lt.s32.totalorder %v91, 0
    %vm112 = vcmp.lt.s32.totalorder %v98, 0
    %vm113 = vcmp.lt.s32.totalorder %v105, 0
    %vm114 = vmand %vm110, %vm106
    %vm115 = vmand %vm111, %vm107
    %vm116 = vmand %vm112, %vm108
    %vm117 = vmand %vm113, %vm109
    %v118 = vadd.s32 %v84, 16
    %v119 = vadd.s32 %v91, 16
    %v120 = vadd.s32 %v98, 16
    %v121 = vadd.s32 %v105, 16
    %v122 = vsel %vm114, %v118, %v84
    %v123 = vsel %vm115, %v119, %v91
    %v124 = vsel %vm116, %v120, %v98
    %v125 = vsel %vm117, %v121, %v105
    %vm126 = vcmp.ne.s32.totalorder %v122, 0
    %vm127 = vcmp.ne.s32.totalorder %v123, 0
    %vm128 = vcmp.ne.s32.totalorder %v124, 0
    %vm129 = vcmp.ne.s32.totalorder %v125, 0
    %v130 = vsel %vm126, 1, 0
    %v131 = vsel %vm127, 1, 0
    %v132 = vsel %vm128, 1, 0
    %v133 = vsel %vm129, 1, 0
    %v134 = vcvt.s32.f32 %v130
    %v135 = vcvt.s32.f32 %v131
    %v136 = vcvt.s32.f32 %v132
    %v137 = vcvt.s32.f32 %v133
    %v138 = vpack.c.bf16 %v135, %v134
    %v139 = vpack.c.bf16 %v137, %v136
    %vm140 = vcmp.ne.s32.totalorder %v122, 15
    %vm141 = vcmp.ne.s32.totalorder %v123, 15
    %vm142 = vcmp.ne.s32.totalorder %v124, 15
    %vm143 = vcmp.ne.s32.totalorder %v125, 15
    %v144 = vsel %vm140, 1, 0
    %v145 = vsel %vm141, 1, 0
    %v146 = vsel %vm142, 1, 0
    %v147 = vsel %vm143, 1, 0
    %v148 = vcvt.s32.f32 %v144
    %v149 = vcvt.s32.f32 %v145
    %v150 = vcvt.s32.f32 %v146
    %v151 = vcvt.s32.f32 %v147
    %v152 = vpack.c.bf16 %v149, %v148
    %v153 = vpack.c.bf16 %v151, %v150
    %v154 = vpack.c.bf16 %v70, %v69
    %v155 = vpack.c.bf16 %v72, %v71
    %v156 = vrot.slane %v69, 7
    %v157 = vrot.slane %v70, 7
    %v158 = vrot.slane %v71, 7
    %v159 = vrot.slane %v72, 7
    %vm160 = vcmp.lt.s32.totalorder %v74, 1
    %v161 = vsel %vm160, %v158, %v159
    %v162 = vsel %vm160, %v157, %v158
    %v163 = vsel %vm160, %v156, %v157
    %v164 = vsel %vm160, %v159, %v156
    %v165 = vpack.c.bf16 %v163, %v164
    %v166 = vpack.c.bf16 %v161, %v162
    %v167 = vmul.bf16 %v165, %v138
    %v168 = vmul.bf16 %v166, %v139
    %v169 = vrot.slane %v69, 1
    %v170 = vrot.slane %v70, 1
    %v171 = vrot.slane %v71, 1
    %v172 = vrot.slane %v72, 1
    %vm173 = vcmp.lt.s32.totalorder %v74, 7
    %v174 = vsel %vm173, %v171, %v172
    %v175 = vsel %vm173, %v170, %v171
    %v176 = vsel %vm173, %v169, %v170
    %v177 = vsel %vm173, %v172, %v169
    %v178 = vpack.c.bf16 %v175, %v176
    %v179 = vpack.c.bf16 %v177, %v174
    %v180 = vmul.bf16 %v178, %v152
    %v181 = vmul.bf16 %v179, %v153
    %v182 = vld [vmem:[#allocation5] sm:$0xf]
    %v183 = vld [vmem:[#allocation5 + $0x4] sm:$0xf]
    %v184 = vld [vmem:[#allocation5 + $0x8] sm:$0xf]
    %v185 = vld [vmem:[#allocation5 + $0xc] sm:$0xf]
    %v186 = vld [vmem:[#allocation5 + $0x10] sm:$0xf]
    %v187 = vld [vmem:[#allocation5 + $0x14] sm:$0xf]
    %v188 = vld [vmem:[#allocation5 + $0x18] sm:$0xf]
    %v189 = vld [vmem:[#allocation5 + $0x1c] sm:$0xf]
    %v190 = vld [vmem:[#allocation5 + $0x20] sm:$0xf]
    %v191 = vld [vmem:[#allocation5 + $0x24] sm:$0xf]
    %v192 = vld [vmem:[#allocation5 + $0x28] sm:$0xf]
    %v193 = vld [vmem:[#allocation5 + $0x2c] sm:$0xf]
    %v194 = vld [vmem:[#allocation5 + $0x30] sm:$0xf]
    %v195 = vld [vmem:[#allocation5 + $0x34] sm:$0xf]
    %v196 = vld [vmem:[#allocation5 + $0x38] sm:$0xf]
    %v197 = vld [vmem:[#allocation5 + $0x3c] sm:$0xf]
    %v198 = vld [vmem:[#allocation5 + $0x40] sm:$0xf]
    %v199 = vld [vmem:[#allocation5 + $0x44] sm:$0xf]
    %v200 = vld [vmem:[#allocation5 + $0x48] sm:$0xf]
    %v201 = vld [vmem:[#allocation5 + $0x4c] sm:$0xf]
    %v202 = vld [vmem:[#allocation5 + $0x50] sm:$0xf]
    %v203 = vld [vmem:[#allocation5 + $0x54] sm:$0xf]
    %v204 = vld [vmem:[#allocation5 + $0x58] sm:$0xf]
    %v205 = vld [vmem:[#allocation5 + $0x5c] sm:$0xf]
    %v206 = vld [vmem:[#allocation5 + $0x60] sm:$0xf]
    %v207 = vld [vmem:[#allocation5 + $0x64] sm:$0xf]
    %v208 = vld [vmem:[#allocation5 + $0x68] sm:$0xf]
    %v209 = vld [vmem:[#allocation5 + $0x6c] sm:$0xf]
    %v210 = vld [vmem:[#allocation5 + $0x70] sm:$0xf]
    %v211 = vld [vmem:[#allocation5 + $0x74] sm:$0xf]
    %v212 = vld [vmem:[#allocation5 + $0x78] sm:$0xf]
    %v213 = vld [vmem:[#allocation5 + $0x7c] sm:$0xf]
    %v214 = vld [vmem:[#allocation5 + $0x80] sm:$0xf]
    %v215 = vld [vmem:[#allocation5 + $0x84] sm:$0xf]
    %v216 = vld [vmem:[#allocation5 + $0x88] sm:$0xf]
    %v217 = vld [vmem:[#allocation5 + $0x8c] sm:$0xf]
    %v218 = vld [vmem:[#allocation5 + $0x90] sm:$0xf]
    %v219 = vld [vmem:[#allocation5 + $0x94] sm:$0xf]
    %v220 = vld [vmem:[#allocation5 + $0x98] sm:$0xf]
    %v221 = vld [vmem:[#allocation5 + $0x9c] sm:$0xf]
    %v222 = vld [vmem:[#allocation5 + $0xa0] sm:$0xf]
    %v223 = vld [vmem:[#allocation5 + $0xa4] sm:$0xf]
    %v224 = vld [vmem:[#allocation5 + $0xa8] sm:$0xf]
    %v225 = vld [vmem:[#allocation5 + $0xac] sm:$0xf]
    %v226 = vld [vmem:[#allocation5 + $0xb0] sm:$0xf]
    %v227 = vld [vmem:[#allocation5 + $0xb4] sm:$0xf]
    %v228 = vld [vmem:[#allocation5 + $0xb8] sm:$0xf]
    %v229 = vld [vmem:[#allocation5 + $0xbc] sm:$0xf]
    %v278 = vunpack.c.l.b16 %v182
    %v279 = vunpack.c.l.b16 %v183
    %v280 = vunpack.c.l.b16 %v184
    %v281 = vunpack.c.l.b16 %v185
    %v282 = vunpack.c.l.b16 %v186
    %v283 = vunpack.c.l.b16 %v187
    %v284 = vunpack.c.l.b16 %v188
    %v285 = vunpack.c.l.b16 %v189
    %v286 = vunpack.c.l.b16 %v190
    %v287 = vunpack.c.l.b16 %v191
    %v288 = vunpack.c.l.b16 %v192
    %v289 = vunpack.c.l.b16 %v193
    %v290 = vunpack.c.l.b16 %v194
    %v291 = vunpack.c.l.b16 %v195
    %v292 = vunpack.c.l.b16 %v196
    %v293 = vunpack.c.l.b16 %v197
    %v294 = vunpack.c.l.b16 %v198
    %v295 = vunpack.c.l.b16 %v199
    %v296 = vunpack.c.l.b16 %v200
    %v297 = vunpack.c.l.b16 %v201
    %v298 = vunpack.c.l.b16 %v202
    %v299 = vunpack.c.l.b16 %v203
    %v300 = vunpack.c.l.b16 %v204
    %v301 = vunpack.c.l.b16 %v205
    %v302 = vunpack.c.l.b16 %v206
    %v303 = vunpack.c.l.b16 %v207
    %v304 = vunpack.c.l.b16 %v208
    %v305 = vunpack.c.l.b16 %v209
    %v306 = vunpack.c.l.b16 %v210
    %v307 = vunpack.c.l.b16 %v211
    %v308 = vunpack.c.l.b16 %v212
    %v309 = vunpack.c.l.b16 %v213
    %v310 = vunpack.c.l.b16 %v214
    %v311 = vunpack.c.l.b16 %v215
    %v312 = vunpack.c.l.b16 %v216
    %v313 = vunpack.c.l.b16 %v217
    %v314 = vunpack.c.l.b16 %v218
    %v315 = vunpack.c.l.b16 %v219
    %v316 = vunpack.c.l.b16 %v220
    %v317 = vunpack.c.l.b16 %v221
    %v318 = vunpack.c.l.b16 %v222
    %v319 = vunpack.c.l.b16 %v223
    %v320 = vunpack.c.l.b16 %v224
    %v321 = vunpack.c.l.b16 %v225
    %v322 = vunpack.c.l.b16 %v226
    %v323 = vunpack.c.l.b16 %v227
    %v324 = vunpack.c.l.b16 %v228
    %v325 = vunpack.c.l.b16 %v229
    %v326 = vpack.c.b16 %v279, %v278
    %v327 = vpack.c.b16 %v281, %v280
    %v328 = vpack.c.b16 %v283, %v282
    %v329 = vpack.c.b16 %v285, %v284
    %v330 = vpack.c.b16 %v287, %v286
    %v331 = vpack.c.b16 %v289, %v288
    %v332 = vpack.c.b16 %v291, %v290
    %v333 = vpack.c.b16 %v293, %v292
    %v334 = vpack.c.b16 %v295, %v294
    %v335 = vpack.c.b16 %v297, %v296
    %v336 = vpack.c.b16 %v299, %v298
    %v337 = vpack.c.b16 %v301, %v300
    %v338 = vpack.c.b16 %v303, %v302
    %v339 = vpack.c.b16 %v305, %v304
    %v340 = vpack.c.b16 %v307, %v306
    %v341 = vpack.c.b16 %v309, %v308
    %v342 = vpack.c.b16 %v311, %v310
    %v343 = vpack.c.b16 %v313, %v312
    %v344 = vpack.c.b16 %v315, %v314
    %v345 = vpack.c.b16 %v317, %v316
    %v346 = vpack.c.b16 %v319, %v318
    %v347 = vpack.c.b16 %v321, %v320
    %v348 = vpack.c.b16 %v323, %v322
    %v349 = vpack.c.b16 %v325, %v324
    %374 = vmatprep.subr.bf16.mxu0 0
    %375 = vmatpush1.bf16.msra.mxu0 %v326
    %376 = vmatprep.subr.bf16.mxu0 0
    %377 = vmatpush1.bf16.msra.mxu0 %v327
    %378 = vmatprep.subr.bf16.mxu0 0
    %379 = vmatpush1.bf16.msra.mxu0 %v328
    %380 = vmatprep.subr.bf16.mxu0 0
    %381 = vmatpush1.bf16.msra.mxu0 %v329
    %382 = vmatprep.subr.bf16.mxu0 0
    %383 = vmatpush1.bf16.msra.mxu0 %v330
    %384 = vmatprep.subr.bf16.mxu0 0
    %385 = vmatpush1.bf16.msra.mxu0 %v331
    %386 = vmatprep.subr.bf16.mxu0 0
    %387 = vmatpush1.bf16.msra.mxu0 %v332
    %388 = vmatprep.subr.bf16.mxu0 0
    %389 = vmatpush1.bf16.msra.mxu0 %v333
    %390 = vmatprep.subr.bf16.mxu0 0
    %391 = vmatpush1.bf16.msra.mxu0 %v334
    %392 = vmatprep.subr.bf16.mxu0 0
    %393 = vmatpush1.bf16.msra.mxu0 %v335
    %394 = vmatprep.subr.bf16.mxu0 0
    %395 = vmatpush1.bf16.msra.mxu0 %v336
    %396 = vmatprep.subr.bf16.mxu0 0
    %397 = vmatpush1.bf16.msra.mxu0 %v337
    %398 = vmatprep.subr.bf16.mxu0 0
    %399 = vmatpush1.bf16.msra.mxu0 %v338
    %400 = vmatprep.subr.bf16.mxu0 0
    %401 = vmatpush1.bf16.msra.mxu0 %v339
    %402 = vmatprep.subr.bf16.mxu0 0
    %403 = vmatpush1.bf16.msra.mxu0 %v340
    %404 = vmatprep.subr.bf16.mxu0 0
    %405 = vmatpush1.bf16.msra.mxu0 %v341
    %406 = vmatprep.mubr.bf16.mxu0 %v154
    %407 = vmatmul.mubr.bf16.gmra.mrb[0].mxu0 %v167
    %v408 = vpop.f32.mrb[0].mxu0
    %v409 = vadd.f32 0.0, %v408
    %v410 = vpop.f32.mrb[0].mxu0
    %v411 = vpop.f32.mrb[0].mxu0
    %v412 = vadd.f32 0.0, %v411
    %v413 = vpop.f32.mrb[0].mxu0
    %414 = vmatprep.mubr.bf16.mxu0 %v155
    %415 = vmatmul.mubr.bf16.gmra.mrb[0].mxu0 %v168
    %v416 = vpop.f32.mrb[0].mxu0
    %v417 = vadd.f32 0.0, %v416
    %v418 = vpop.f32.mrb[0].mxu0
    %v419 = vpop.f32.mrb[0].mxu0
    %v420 = vadd.f32 0.0, %v419
    %v421 = vpop.f32.mrb[0].mxu0
    %422 = vdwg.mxu0
    %423 = vmatprep.subr.bf16.mxu0 0
    %424 = vmatpush1.bf16.msra.mxu0 %v342
    %425 = vmatprep.subr.bf16.mxu0 0
    %426 = vmatpush1.bf16.msra.mxu0 %v343
    %427 = vmatprep.subr.bf16.mxu0 0
    %428 = vmatpush1.bf16.msra.mxu0 %v344
    %429 = vmatprep.subr.bf16.mxu0 0
    %430 = vmatpush1.bf16.msra.mxu0 %v345
    %431 = vmatprep.subr.bf16.mxu0 0
    %432 = vmatpush1.bf16.msra.mxu0 %v346
    %433 = vmatprep.subr.bf16.mxu0 0
    %434 = vmatpush1.bf16.msra.mxu0 %v347
    %435 = vmatprep.subr.bf16.mxu0 0
    %436 = vmatpush1.bf16.msra.mxu0 %v348
    %437 = vmatprep.subr.bf16.mxu0 0
    %438 = vmatpush1.bf16.msra.mxu0 %v349
    %439 = vmatprep.subr.bf16.mxu0 0
    %440 = vmatpush1.bf16.msra.mxu0 0
    %441 = vmatprep.subr.bf16.mxu0 0
    %442 = vmatpush1.bf16.msra.mxu0 0
    %443 = vmatprep.subr.bf16.mxu0 0
    %444 = vmatpush1.bf16.msra.mxu0 0
    %445 = vmatprep.subr.bf16.mxu0 0
    %446 = vmatpush1.bf16.msra.mxu0 0
    %447 = vmatprep.subr.bf16.mxu0 0
    %448 = vmatpush1.bf16.msra.mxu0 0
    %449 = vmatprep.subr.bf16.mxu0 0
    %450 = vmatpush1.bf16.msra.mxu0 0
    %451 = vmatprep.subr.bf16.mxu0 0
    %452 = vmatpush1.bf16.msra.mxu0 0
    %453 = vmatprep.subr.bf16.mxu0 0
    %454 = vmatpush1.bf16.msra.mxu0 0
    %455 = vmatprep.mubr.bf16.mxu0 0
    %456 = vmatmul.mubr.bf16.gmra.mrb[0].mxu0 %v180
    %v457 = vpop.f32.mrb[0].mxu0
    %v458 = vadd.f32 %v409, %v457
    %v459 = vpop.f32.mrb[0].mxu0
    %v460 = vpop.f32.mrb[0].mxu0
    %v461 = vadd.f32 %v412, %v460
    %v462 = vpop.f32.mrb[0].mxu0
    %463 = vmatprep.mubr.bf16.mxu0 0
    %464 = vmatmul.mubr.bf16.gmra.mrb[0].mxu0 %v181
    %v465 = vpop.f32.mrb[0].mxu0
    %v466 = vadd.f32 %v417, %v465
    %v467 = vpop.f32.mrb[0].mxu0
    %v468 = vpop.f32.mrb[0].mxu0
    %v469 = vadd.f32 %v420, %v468
    %v470 = vpop.f32.mrb[0].mxu0
    %471 = vdwg.mxu0
    %v472 = vld [vmem:[%s2] sm:$0x1]
    %v473 = vld [vmem:[%s3] sm:$0x1]
    %v474 = vadd.f32 %v458, %v461
    %v475 = vadd.f32 %v474, %v466
    %v476 = vadd.f32 %v475, %v469
    %v477 = vrot.slane %v476, 4
    %v478 = vadd.f32 %v476, %v477
    %v479 = vrot.slane %v478, 2
    %v480 = vadd.f32 %v478, %v479
    %v481 = vrot.slane %v480, 1
    %v482 = vadd.f32 %v480, %v481
    %v483 = vmul.f32 %v458, %v458
    %v484 = vmul.f32 %v461, %v461
    %v485 = vmul.f32 %v466, %v466
    %v486 = vmul.f32 %v469, %v469
    %v487 = vadd.f32 %v483, %v484
    %v488 = vadd.f32 %v487, %v485
    %v489 = vadd.f32 %v488, %v486
    %v490 = vrot.slane %v489, 4
    %v491 = vadd.f32 %v489, %v490
    %v492 = vrot.slane %v491, 2
    %v493 = vadd.f32 %v491, %v492
    %v494 = vrot.slane %v493, 1
    %v495 = vadd.f32 %v493, %v494
    %vm496 = vcmask 1040384
    %v497 = vsel %vm496, %v482, %v495
    %498 = vrot.lane.b32.xlu0 %v497, 64
    %v499 = vpop.permute.xlu0 %498
    %v500 = vadd.f32 %v497, %v499
    %501 = vrot.lane.b32.xlu0 %v500, 32
    %v502 = vpop.permute.xlu0 %501
    %v503 = vadd.f32 %v500, %v502
    %504 = vrot.lane.b32.xlu0 %v503, 16
    %v505 = vpop.permute.xlu0 %504
    %v506 = vadd.f32 %v503, %v505
    %507 = vrot.lane.b32.xlu0 %v506, 8
    %v508 = vpop.permute.xlu0 %507
    %v509 = vadd.f32 %v506, %v508
    %v510 = vmul.f32 %v509, 0.001953125
    %v511 = vmul.f32 %v510, %v510
    %v513 = vrot.slane %v511, 7
    %v515 = vsub.f32 %v510, %v513
    %v516 = vlaneseq
    %v517 = vshrl.u32 %v516, 7
    %v518 = vsub.s32 0, %v517
    %v519 = vrot.slane %v510, %v518
    %v520 = vsub.f32 %v458, %v519
    %v521 = vsub.f32 %v461, %v519
    %v522 = vsub.f32 %v466, %v519
    %v523 = vsub.f32 %v469, %v519
    %v524 = vadd.f32 %v515, 1e-05
    %v525 = vrsqrt.pop %v524
    %v526 = vlaneseq
    %v527 = vshrl.u32 %v526, 7
    %v528 = vsub.s32 1, %v527
    %v529 = vrot.slane %v525, %v528
    %v530 = vmul.f32 %v520, %v529
    %v531 = vmul.f32 %v521, %v529
    %v532 = vmul.f32 %v522, %v529
    %v533 = vmul.f32 %v523, %v529
    %v535 = vlaneseq
    %v536 = vshrl.u32 %v535, 7
    %v537 = vsub.s32 0, %v536
    %v538 = vrot.slane %v472, %v537
    %v540 = vmul.f32 %v530, %v538
    %v541 = vmul.f32 %v531, %v538
    %v542 = vmul.f32 %v532, %v538
    %v543 = vmul.f32 %v533, %v538
    %v545 = vlaneseq
    %v546 = vshrl.u32 %v545, 7
    %v547 = vsub.s32 0, %v546
    %v548 = vrot.slane %v473, %v547
    %v550 = vadd.f32 %v540, %v548
    %v551 = vadd.f32 %v541, %v548
    %v552 = vadd.f32 %v542, %v548
    %v553 = vadd.f32 %v543, %v548
    %v554 = vmax.f32 %v550, 0.0
    %v555 = vmax.f32 %v551, 0.0
    %v556 = vmax.f32 %v552, 0.0
    %v557 = vmax.f32 %v553, 0.0
    %v558 = vpack.c.bf16 %v555, %v554
    %v559 = vpack.c.bf16 %v557, %v556
    %v560 = vrot.slane %v554, 7
    %v561 = vrot.slane %v555, 7
    %v562 = vrot.slane %v556, 7
    %v563 = vrot.slane %v557, 7
    %v564 = vsel %vm160, %v562, %v563
    %v565 = vsel %vm160, %v561, %v562
    %v566 = vsel %vm160, %v560, %v561
    %v567 = vsel %vm160, %v563, %v560
    %v568 = vpack.c.bf16 %v566, %v567
    %v569 = vpack.c.bf16 %v564, %v565
    %v570 = vmul.bf16 %v568, %v138
    %v571 = vmul.bf16 %v569, %v139
    %v572 = vrot.slane %v554, 1
    %v573 = vrot.slane %v555, 1
    %v574 = vrot.slane %v556, 1
    %v575 = vrot.slane %v557, 1
    %v576 = vsel %vm173, %v574, %v575
    %v577 = vsel %vm173, %v573, %v574
    %v578 = vsel %vm173, %v572, %v573
    %v579 = vsel %vm173, %v575, %v572
    %v580 = vpack.c.bf16 %v577, %v578
    %v581 = vpack.c.bf16 %v579, %v576
    %v582 = vmul.bf16 %v580, %v152
    %v583 = vmul.bf16 %v581, %v153
    %v584 = vld [vmem:[#allocation7] sm:$0xf]
    %v585 = vld [vmem:[#allocation7 + $0x4] sm:$0xf]
    %v586 = vld [vmem:[#allocation7 + $0x8] sm:$0xf]
    %v587 = vld [vmem:[#allocation7 + $0xc] sm:$0xf]
    %v588 = vld [vmem:[#allocation7 + $0x10] sm:$0xf]
    %v589 = vld [vmem:[#allocation7 + $0x14] sm:$0xf]
    %v590 = vld [vmem:[#allocation7 + $0x18] sm:$0xf]
    %v591 = vld [vmem:[#allocation7 + $0x1c] sm:$0xf]
    %v592 = vld [vmem:[#allocation7 + $0x20] sm:$0xf]
    %v593 = vld [vmem:[#allocation7 + $0x24] sm:$0xf]
    %v594 = vld [vmem:[#allocation7 + $0x28] sm:$0xf]
    %v595 = vld [vmem:[#allocation7 + $0x2c] sm:$0xf]
    %v596 = vld [vmem:[#allocation7 + $0x30] sm:$0xf]
    %v597 = vld [vmem:[#allocation7 + $0x34] sm:$0xf]
    %v598 = vld [vmem:[#allocation7 + $0x38] sm:$0xf]
    %v599 = vld [vmem:[#allocation7 + $0x3c] sm:$0xf]
    %v600 = vld [vmem:[#allocation7 + $0x40] sm:$0xf]
    %v601 = vld [vmem:[#allocation7 + $0x44] sm:$0xf]
    %v602 = vld [vmem:[#allocation7 + $0x48] sm:$0xf]
    %v603 = vld [vmem:[#allocation7 + $0x4c] sm:$0xf]
    %v604 = vld [vmem:[#allocation7 + $0x50] sm:$0xf]
    %v605 = vld [vmem:[#allocation7 + $0x54] sm:$0xf]
    %v606 = vld [vmem:[#allocation7 + $0x58] sm:$0xf]
    %v607 = vld [vmem:[#allocation7 + $0x5c] sm:$0xf]
    %v608 = vld [vmem:[#allocation7 + $0x60] sm:$0xf]
    %v609 = vld [vmem:[#allocation7 + $0x64] sm:$0xf]
    %v610 = vld [vmem:[#allocation7 + $0x68] sm:$0xf]
    %v611 = vld [vmem:[#allocation7 + $0x6c] sm:$0xf]
    %v612 = vld [vmem:[#allocation7 + $0x70] sm:$0xf]
    %v613 = vld [vmem:[#allocation7 + $0x74] sm:$0xf]
    %v614 = vld [vmem:[#allocation7 + $0x78] sm:$0xf]
    %v615 = vld [vmem:[#allocation7 + $0x7c] sm:$0xf]
    %v616 = vld [vmem:[#allocation7 + $0x80] sm:$0xf]
    %v617 = vld [vmem:[#allocation7 + $0x84] sm:$0xf]
    %v618 = vld [vmem:[#allocation7 + $0x88] sm:$0xf]
    %v619 = vld [vmem:[#allocation7 + $0x8c] sm:$0xf]
    %v620 = vld [vmem:[#allocation7 + $0x90] sm:$0xf]
    %v621 = vld [vmem:[#allocation7 + $0x94] sm:$0xf]
    %v622 = vld [vmem:[#allocation7 + $0x98] sm:$0xf]
    %v623 = vld [vmem:[#allocation7 + $0x9c] sm:$0xf]
    %v624 = vld [vmem:[#allocation7 + $0xa0] sm:$0xf]
    %v625 = vld [vmem:[#allocation7 + $0xa4] sm:$0xf]
    %v626 = vld [vmem:[#allocation7 + $0xa8] sm:$0xf]
    %v627 = vld [vmem:[#allocation7 + $0xac] sm:$0xf]
    %v628 = vld [vmem:[#allocation7 + $0xb0] sm:$0xf]
    %v629 = vld [vmem:[#allocation7 + $0xb4] sm:$0xf]
    %v630 = vld [vmem:[#allocation7 + $0xb8] sm:$0xf]
    %v631 = vld [vmem:[#allocation7 + $0xbc] sm:$0xf]
    %v680 = vunpack.c.l.b16 %v584
    %v681 = vunpack.c.l.b16 %v585
    %v682 = vunpack.c.l.b16 %v586
    %v683 = vunpack.c.l.b16 %v587
    %v684 = vunpack.c.l.b16 %v588
    %v685 = vunpack.c.l.b16 %v589
    %v686 = vunpack.c.l.b16 %v590
    %v687 = vunpack.c.l.b16 %v591
    %v688 = vunpack.c.l.b16 %v592
    %v689 = vunpack.c.l.b16 %v593
    %v690 = vunpack.c.l.b16 %v594
    %v691 = vunpack.c.l.b16 %v595
    %v692 = vunpack.c.l.b16 %v596
    %v693 = vunpack.c.l.b16 %v597
    %v694 = vunpack.c.l.b16 %v598
    %v695 = vunpack.c.l.b16 %v599
    %v696 = vunpack.c.l.b16 %v600
    %v697 = vunpack.c.l.b16 %v601
    %v698 = vunpack.c.l.b16 %v602
    %v699 = vunpack.c.l.b16 %v603
    %v700 = vunpack.c.l.b16 %v604
    %v701 = vunpack.c.l.b16 %v605
    %v702 = vunpack.c.l.b16 %v606
    %v703 = vunpack.c.l.b16 %v607
    %v704 = vunpack.c.l.b16 %v608
    %v705 = vunpack.c.l.b16 %v609
    %v706 = vunpack.c.l.b16 %v610
    %v707 = vunpack.c.l.b16 %v611
    %v708 = vunpack.c.l.b16 %v612
    %v709 = vunpack.c.l.b16 %v613
    %v710 = vunpack.c.l.b16 %v614
    %v711 = vunpack.c.l.b16 %v615
    %v712 = vunpack.c.l.b16 %v616
    %v713 = vunpack.c.l.b16 %v617
    %v714 = vunpack.c.l.b16 %v618
    %v715 = vunpack.c.l.b16 %v619
    %v716 = vunpack.c.l.b16 %v620
    %v717 = vunpack.c.l.b16 %v621
    %v718 = vunpack.c.l.b16 %v622
    %v719 = vunpack.c.l.b16 %v623
    %v720 = vunpack.c.l.b16 %v624
    %v721 = vunpack.c.l.b16 %v625
    %v722 = vunpack.c.l.b16 %v626
    %v723 = vunpack.c.l.b16 %v627
    %v724 = vunpack.c.l.b16 %v628
    %v725 = vunpack.c.l.b16 %v629
    %v726 = vunpack.c.l.b16 %v630
    %v727 = vunpack.c.l.b16 %v631
    %v728 = vpack.c.b16 %v681, %v680
    %v729 = vpack.c.b16 %v683, %v682
    %v730 = vpack.c.b16 %v685, %v684
    %v731 = vpack.c.b16 %v687, %v686
    %v732 = vpack.c.b16 %v689, %v688
    %v733 = vpack.c.b16 %v691, %v690
    %v734 = vpack.c.b16 %v693, %v692
    %v735 = vpack.c.b16 %v695, %v694
    %v736 = vpack.c.b16 %v697, %v696
    %v737 = vpack.c.b16 %v699, %v698
    %v738 = vpack.c.b16 %v701, %v700
    %v739 = vpack.c.b16 %v703, %v702
    %v740 = vpack.c.b16 %v705, %v704
    %v741 = vpack.c.b16 %v707, %v706
    %v742 = vpack.c.b16 %v709, %v708
    %v743 = vpack.c.b16 %v711, %v710
    %v744 = vpack.c.b16 %v713, %v712
    %v745 = vpack.c.b16 %v715, %v714
    %v746 = vpack.c.b16 %v717, %v716
    %v747 = vpack.c.b16 %v719, %v718
    %v748 = vpack.c.b16 %v721, %v720
    %v749 = vpack.c.b16 %v723, %v722
    %v750 = vpack.c.b16 %v725, %v724
    %v751 = vpack.c.b16 %v727, %v726
    %776 = vmatprep.subr.bf16.mxu0 0
    %777 = vmatpush1.bf16.msra.mxu0 %v728
    %778 = vmatprep.subr.bf16.mxu0 0
    %779 = vmatpush1.bf16.msra.mxu0 %v729
    %780 = vmatprep.subr.bf16.mxu0 0
    %781 = vmatpush1.bf16.msra.mxu0 %v730
    %782 = vmatprep.subr.bf16.mxu0 0
    %783 = vmatpush1.bf16.msra.mxu0 %v731
    %784 = vmatprep.subr.bf16.mxu0 0
    %785 = vmatpush1.bf16.msra.mxu0 %v732
    %786 = vmatprep.subr.bf16.mxu0 0
    %787 = vmatpush1.bf16.msra.mxu0 %v733
    %788 = vmatprep.subr.bf16.mxu0 0
    %789 = vmatpush1.bf16.msra.mxu0 %v734
    %790 = vmatprep.subr.bf16.mxu0 0
    %791 = vmatpush1.bf16.msra.mxu0 %v735
    %792 = vmatprep.subr.bf16.mxu0 0
    %793 = vmatpush1.bf16.msra.mxu0 %v736
    %794 = vmatprep.subr.bf16.mxu0 0
    %795 = vmatpush1.bf16.msra.mxu0 %v737
    %796 = vmatprep.subr.bf16.mxu0 0
    %797 = vmatpush1.bf16.msra.mxu0 %v738
    %798 = vmatprep.subr.bf16.mxu0 0
    %799 = vmatpush1.bf16.msra.mxu0 %v739
    %800 = vmatprep.subr.bf16.mxu0 0
    %801 = vmatpush1.bf16.msra.mxu0 %v740
    %802 = vmatprep.subr.bf16.mxu0 0
    %803 = vmatpush1.bf16.msra.mxu0 %v741
    %804 = vmatprep.subr.bf16.mxu0 0
    %805 = vmatpush1.bf16.msra.mxu0 %v742
    %806 = vmatprep.subr.bf16.mxu0 0
    %807 = vmatpush1.bf16.msra.mxu0 %v743
    %808 = vmatprep.mubr.bf16.mxu0 %v558
    %809 = vmatmul.mubr.bf16.gmra.mrb[0].mxu0 %v570
    %v810 = vpop.f32.mrb[0].mxu0
    %v811 = vadd.f32 0.0, %v810
    %v812 = vpop.f32.mrb[0].mxu0
    %v813 = vpop.f32.mrb[0].mxu0
    %v814 = vadd.f32 0.0, %v813
    %v815 = vpop.f32.mrb[0].mxu0
    %816 = vmatprep.mubr.bf16.mxu0 %v559
    %817 = vmatmul.mubr.bf16.gmra.mrb[0].mxu0 %v571
    %v818 = vpop.f32.mrb[0].mxu0
    %v819 = vadd.f32 0.0, %v818
    %v820 = vpop.f32.mrb[0].mxu0
    %v821 = vpop.f32.mrb[0].mxu0
    %v822 = vadd.f32 0.0, %v821
    %v823 = vpop.f32.mrb[0].mxu0
    %824 = vdwg.mxu0
    %825 = vmatprep.subr.bf16.mxu0 0
    %826 = vmatpush1.bf16.msra.mxu0 %v744
    %827 = vmatprep.subr.bf16.mxu0 0
    %828 = vmatpush1.bf16.msra.mxu0 %v745
    %829 = vmatprep.subr.bf16.mxu0 0
    %830 = vmatpush1.bf16.msra.mxu0 %v746
    %831 = vmatprep.subr.bf16.mxu0 0
    %832 = vmatpush1.bf16.msra.mxu0 %v747
    %833 = vmatprep.subr.bf16.mxu0 0
    %834 = vmatpush1.bf16.msra.mxu0 %v748
    %835 = vmatprep.subr.bf16.mxu0 0
    %836 = vmatpush1.bf16.msra.mxu0 %v749
    %837 = vmatprep.subr.bf16.mxu0 0
    %838 = vmatpush1.bf16.msra.mxu0 %v750
    %839 = vmatprep.subr.bf16.mxu0 0
    %840 = vmatpush1.bf16.msra.mxu0 %v751
    %841 = vmatprep.subr.bf16.mxu0 0
    %842 = vmatpush1.bf16.msra.mxu0 0
    %843 = vmatprep.subr.bf16.mxu0 0
    %844 = vmatpush1.bf16.msra.mxu0 0
    %845 = vmatprep.subr.bf16.mxu0 0
    %846 = vmatpush1.bf16.msra.mxu0 0
    %847 = vmatprep.subr.bf16.mxu0 0
    %848 = vmatpush1.bf16.msra.mxu0 0
    %849 = vmatprep.subr.bf16.mxu0 0
    %850 = vmatpush1.bf16.msra.mxu0 0
    %851 = vmatprep.subr.bf16.mxu0 0
    %852 = vmatpush1.bf16.msra.mxu0 0
    %853 = vmatprep.subr.bf16.mxu0 0
    %854 = vmatpush1.bf16.msra.mxu0 0
    %855 = vmatprep.subr.bf16.mxu0 0
    %856 = vmatpush1.bf16.msra.mxu0 0
    %857 = vmatprep.mubr.bf16.mxu0 0
    %858 = vmatmul.mubr.bf16.gmra.mrb[0].mxu0 %v582
    %v859 = vpop.f32.mrb[0].mxu0
    %v860 = vadd.f32 %v811, %v859
    %v861 = vpop.f32.mrb[0].mxu0
    %v862 = vpop.f32.mrb[0].mxu0
    %v863 = vadd.f32 %v814, %v862
    %v864 = vpop.f32.mrb[0].mxu0
    %865 = vmatprep.mubr.bf16.mxu0 0
    %866 = vmatmul.mubr.bf16.gmra.mrb[0].mxu0 %v583
    %v867 = vpop.f32.mrb[0].mxu0
    %v868 = vadd.f32 %v819, %v867
    %v869 = vpop.f32.mrb[0].mxu0
    %v870 = vpop.f32.mrb[0].mxu0
    %v871 = vadd.f32 %v822, %v870
    %v872 = vpop.f32.mrb[0].mxu0
    %873 = vdwg.mxu0
    %v874 = vld [vmem:[%s5] sm:$0x1]
    %v875 = vld [vmem:[%s6] sm:$0x1]
    %v876 = vadd.f32 %v860, %v863
    %v877 = vadd.f32 %v876, %v868
    %v878 = vadd.f32 %v877, %v871
    %v879 = vrot.slane %v878, 4
    %v880 = vadd.f32 %v878, %v879
    %v881 = vrot.slane %v880, 2
    %v882 = vadd.f32 %v880, %v881
    %v883 = vrot.slane %v882, 1
    %v884 = vadd.f32 %v882, %v883
    %v885 = vmul.f32 %v860, %v860
    %v886 = vmul.f32 %v863, %v863
    %v887 = vmul.f32 %v868, %v868
    %v888 = vmul.f32 %v871, %v871
    %v889 = vadd.f32 %v885, %v886
    %v890 = vadd.f32 %v889, %v887
    %v891 = vadd.f32 %v890, %v888
    %v892 = vrot.slane %v891, 4
    %v893 = vadd.f32 %v891, %v892
    %v894 = vrot.slane %v893, 2
    %v895 = vadd.f32 %v893, %v894
    %v896 = vrot.slane %v895, 1
    %v897 = vadd.f32 %v895, %v896
    %v898 = vsel %vm496, %v884, %v897
    %899 = vrot.lane.b32.xlu0 %v898, 64
    %v900 = vpop.permute.xlu0 %899
    %v901 = vadd.f32 %v898, %v900
    %902 = vrot.lane.b32.xlu0 %v901, 32
    %v903 = vpop.permute.xlu0 %902
    %v904 = vadd.f32 %v901, %v903
    %905 = vrot.lane.b32.xlu0 %v904, 16
    %v906 = vpop.permute.xlu0 %905
    %v907 = vadd.f32 %v904, %v906
    %908 = vrot.lane.b32.xlu0 %v907, 8
    %v909 = vpop.permute.xlu0 %908
    %v910 = vadd.f32 %v907, %v909
    %v911 = vmul.f32 %v910, 0.001953125
    %v912 = vmul.f32 %v911, %v911
    %v914 = vrot.slane %v912, 7
    %v916 = vsub.f32 %v911, %v914
    %v917 = vlaneseq
    %v918 = vshrl.u32 %v917, 7
    %v919 = vsub.s32 0, %v918
    %v920 = vrot.slane %v911, %v919
    %v921 = vsub.f32 %v860, %v920
    %v922 = vsub.f32 %v863, %v920
    %v923 = vsub.f32 %v868, %v920
    %v924 = vsub.f32 %v871, %v920
    %v925 = vadd.f32 %v916, 1e-05
    %v926 = vrsqrt.pop %v925
    %v927 = vlaneseq
    %v928 = vshrl.u32 %v927, 7
    %v929 = vsub.s32 1, %v928
    %v930 = vrot.slane %v926, %v929
    %v931 = vmul.f32 %v921, %v930
    %v932 = vmul.f32 %v922, %v930
    %v933 = vmul.f32 %v923, %v930
    %v934 = vmul.f32 %v924, %v930
    %v936 = vlaneseq
    %v937 = vshrl.u32 %v936, 7
    %v938 = vsub.s32 0, %v937
    %v939 = vrot.slane %v874, %v938
    %v941 = vmul.f32 %v931, %v939
    %v942 = vmul.f32 %v932, %v939
    %v943 = vmul.f32 %v933, %v939
    %v944 = vmul.f32 %v934, %v939
    %v946 = vlaneseq
    %v947 = vshrl.u32 %v946, 7
    %v948 = vsub.s32 0, %v947
    %v949 = vrot.slane %v875, %v948
    %v951 = vadd.f32 %v941, %v949
    %v952 = vadd.f32 %v942, %v949
    %v953 = vadd.f32 %v943, %v949
    %v954 = vadd.f32 %v944, %v949
    %v955 = vadd.f32 %v951, %v69
    %v956 = vadd.f32 %v952, %v70
    %v957 = vadd.f32 %v953, %v71
    %v958 = vadd.f32 %v954, %v72
    %v959 = vmax.f32 %v955, 0.0
    %v960 = vmax.f32 %v956, 0.0
    %v961 = vmax.f32 %v957, 0.0
    %v962 = vmax.f32 %v958, 0.0
    %963 = vst [vmem:[#allocation8] sm:$0xff] %v959
    %964 = vst [vmem:[#allocation8 + $0x8] sm:$0xff] %v960
    %965 = vst [vmem:[#allocation8 + $0x10] sm:$0xff] %v961
    %966 = vst [vmem:[#allocation8 + $0x18] sm:$0xff] %v962
    // Predicated region
    $region42: #{tpu_custom_call.1} parent=1 // pred_check
      _
    $region43: #{tpu_custom_call.1} parent=1 // pred_check_branch
      %968 = sbr.rel (0) target = $region45
    $region44: #{tpu_custom_call.1} parent=1 // pred_region
      %s970 = ssub.s32 512, 512
      %971 = vsyncadd [#allocation4], %s970
      %s972 = sshll.u32 [#allocation8], 4
      %s973 = int_to_ptr.vmem [resolvable:$true] %s972
      %978 = dma.vmem_to_hbm [thread:$0]  %s973, 512, %s7, [#allocation4], 128, 128, 8
    $region45: #{tpu_custom_call.1} parent=1 // pred_fallthru
      _
    // Predicated region
    $region46: #{tpu_custom_call.1} parent=1 // pred_check
      _
    $region47: #{tpu_custom_call.1} parent=1 // pred_check_branch
      %980 = sbr.rel (0) target = $region49
    $region48: #{tpu_custom_call.1} parent=1 // pred_region
      %981 = dma.done [#allocation4], 512
    $region49: #{tpu_custom_call.1} parent=1 // pred_fallthru
      _
    %982 = vsyncpa [#allocation3], 1
    %983 = vsyncpa [#allocation6], 1
    %984 = vsyncpa [#allocation4], 1

</llo_original>
